<compile_context>
chip_gen: v5e
topology: v5e:2x2
jax: 0.10.0
libtpu: 0.0.40
codegen_flags: <defaults>
</compile_context>

<pallas_src>
import jax
import jax.numpy as jnp
from jax.experimental import pallas as pl
from jax.experimental.pallas import tpu as pltpu

_D = 768  # BERT-base hidden size


def _round_up(x, m):
    return ((x + m - 1) // m) * m


def bert_classifier_kernel(x_ref, w_ref, b_ref, o_ref):
    # x_ref: [b_tile, 768] f32   CLS-token feature tile (bf16 cast done here,
    #                            not in a separate wrapper HBM pass)
    # w_ref: [768, C_pad]  bf16  pre-transposed nn.Linear weight, VMEM-resident
    # b_ref: [1, C_pad]    f32   bias row, VMEM-resident
    # o_ref: [b_tile, C_pad]     logits tile (f32 or bf16)
    x = x_ref[...].astype(jnp.bfloat16)
    acc = jnp.dot(x, w_ref[...], preferred_element_type=jnp.float32)
    o_ref[...] = (acc + b_ref[...]).astype(o_ref.dtype)


def prepare_classifier_params(weight, bias):
    """One-time (per parameter update) prep of the nn.Linear head.

    weight: [C, 768] f32 (PyTorch nn.Linear layout), bias: [C] f32.
    Returns (w_t [768, C_pad] bf16, b_p [1, C_pad] f32) with C_pad a multiple
    of 128 (lane-dense stores, dense weight DMA).  Cache the result - do NOT
    recompute per forward call.
    """
    C, D = weight.shape
    C_pad = _round_up(max(C, 128), 128)
    w_t = jnp.pad(weight.T.astype(jnp.bfloat16), ((0, 0), (0, C_pad - C)))
    b_p = jnp.pad(bias.astype(jnp.float32), (0, C_pad - C)).reshape(1, C_pad)
    return w_t, b_p


def _choose_batch_tile(B, max_tile):
    """Pick (b_tile, grid_steps) with minimal waste.

    - B < 16: a single full-extent block (no padding, no partial blocks).
    - B >= 16: an even number of >= 2 grid steps (v7x megacore gets both
      TensorCores busy), tile rounded to the sublane multiple of 8, tile
      capped by max_tile.  Partial last blocks are handled by Pallas masking.
    """
    if B < 16:
        return B, 1
    n = pl.cdiv(B, max_tile)
    n = max(2 * pl.cdiv(n, 2), 2)          # >= 2 steps, even count
    b_tile = _round_up(pl.cdiv(B, n), 8)
    return b_tile, pl.cdiv(B, b_tile)


def bert_classifier_forward(cls_token, w_t, b_p, *, num_classes=None,
                            max_tile=1024, out_dtype=jnp.float32,
                            trim_classes=True):
    """Classifier head of BertClassifier: logits = cls_token @ W.T + b.

    cls_token: [B, 768] f32 CLS hidden state from the frozen backbone.
    w_t, b_p:  prepared once by prepare_classifier_params (cached).
    Returns [B, num_classes] when trim_classes=True (module semantics), or the
    lane-dense padded [B, C_pad] when trim_classes=False (lets the consumer
    mask pad columns and skip an extra HBM pass over the logits).
    """
    B, D = cls_token.shape
    C_pad = w_t.shape[1]
    b_tile, steps = _choose_batch_tile(B, max_tile)

    # Per-step VMEM estimate (double-buffered feature / output tiles + resident
    # weight & bias).  Only raise the scoped limit when the default 16 MiB
    # would not fit (e.g. max_tile swept to 2048 on v5e).
    out_itemsize = jnp.dtype(out_dtype).itemsize
    vmem_needed = (2 * b_tile * D * cls_token.dtype.itemsize
                   + 2 * b_tile * C_pad * out_itemsize
                   + 2 * D * C_pad * w_t.dtype.itemsize
                   + 2 * C_pad * 4) + (2 << 20)
    vmem_limit = int(vmem_needed) if vmem_needed > (16 << 20) else None

    out = pl.pallas_call(
        bert_classifier_kernel,
        out_shape=jax.ShapeDtypeStruct((B, C_pad), out_dtype),
        grid=(steps,),
        in_specs=[
            pl.BlockSpec((b_tile, D), lambda i: (i, 0)),    # batch tile of features
            pl.BlockSpec((D, C_pad), lambda i: (0, 0)),     # weights stay VMEM-resident
            pl.BlockSpec((1, C_pad), lambda i: (0, 0)),     # bias stays VMEM-resident
        ],
        out_specs=pl.BlockSpec((b_tile, C_pad), lambda i: (i, 0)),
        compiler_params=pltpu.CompilerParams(
            dimension_semantics=("parallel",),
            vmem_limit_bytes=vmem_limit,
        ),
    )(cls_token, w_t, b_p)

    if trim_classes:
        assert num_classes is not None, "num_classes required when trim_classes=True"
        out = out[:, :num_classes]
    return out


if __name__ == "__main__":
    # Small deterministic setup consistent with the module:
    #   BERT-base CLS hidden size = 768, food101 classes C = 101, batch B = 4.
    B, D, C = 4, 768, 101

    key = jax.random.PRNGKey(0)
    k1, k2, k3 = jax.random.split(key, 3)

    # Stand-in for the frozen BERT backbone's CLS-token hidden state.
    cls_token = jax.random.normal(k1, (B, D), dtype=jnp.float32)

    # Trainable classifier head parameters (PyTorch nn.Linear layout [C, D]).
    weight = jax.random.normal(k2, (C, D), dtype=jnp.float32) * 0.02
    bias = jax.random.normal(k3, (C,), dtype=jnp.float32) * 0.02

    # Hoisted, cached parameter prep (constant per forward step).
    w_t, b_p = jax.block_until_ready(prepare_classifier_params(weight, bias))

    logits = bert_classifier_forward(cls_token, w_t, b_p, num_classes=C)
    jax.block_until_ready(logits)
    assert logits.shape == (B, C)

    # Reference with the same bf16 rounding as the MXU path (f32 accumulation).
    x_bf = cls_token.astype(jnp.bfloat16).astype(jnp.float32)
    w_bf = weight.astype(jnp.bfloat16).astype(jnp.float32)
    ref = x_bf @ w_bf.T + bias
    assert jnp.allclose(logits, ref, atol=1e-2, rtol=1e-2), float(
        jnp.max(jnp.abs(logits - ref)))

    # Deferred-slice path: lane-dense padded logits for downstream consumers.
    padded = bert_classifier_forward(cls_token, w_t, b_p, num_classes=C,
                                     trim_classes=False)
    jax.block_until_ready(padded)
    assert padded.shape == (B, w_t.shape[1]) and padded.shape[1] % 128 == 0
    assert jnp.allclose(padded[:, :C], ref, atol=1e-2, rtol=1e-2)

    print("KERNEL_OK")
</pallas_src>

<mosaic_0001>
module attributes {stable_mosaic.version = 11 : i64} {
  func.func @bert_classifier_kernel(%arg0: i32, %arg1: memref<4x768xf32, #tpu.memory_space<vmem>>, %arg2: memref<768x128xbf16, #tpu.memory_space<vmem>>, %arg3: memref<1x128xf32, #tpu.memory_space<vmem>>, %arg4: memref<4x128xf32, #tpu.memory_space<vmem>>) attributes {dimension_semantics = [#tpu.dimension_semantics<parallel>], iteration_bounds = array<i64: 1>, scalar_prefetch = 0 : i64, scratch_operands = 0 : i64, tpu.core_type = #tpu.core_type<tc>, window_params = [{transform_indices = @transform_0, window_bounds = array<i64: 4, 768>}, {pipeline_mode = #tpu.pipeline_mode<synchronous>, transform_indices = @transform_1, window_bounds = array<i64: 768, 128>}, {pipeline_mode = #tpu.pipeline_mode<synchronous>, transform_indices = @transform_2, window_bounds = array<i64: 1, 128>}, {transform_indices = @transform_3, window_bounds = array<i64: 4, 128>}]} {
    %c0 = arith.constant 0 : index
    %c0_0 = arith.constant 0 : index
    %0 = vector.load %arg1[%c0, %c0_0] : memref<4x768xf32, #tpu.memory_space<vmem>>, vector<4x768xf32>
    %1 = arith.truncf %0 : vector<4x768xf32> to vector<4x768xbf16>
    %c0_1 = arith.constant 0 : index
    %c0_2 = arith.constant 0 : index
    %2 = vector.load %arg2[%c0_1, %c0_2] : memref<768x128xbf16, #tpu.memory_space<vmem>>, vector<768x128xbf16>
    %cst = arith.constant dense<0.000000e+00> : vector<4x128xf32>
    %3 = tpu.matmul %1, %2, %cst {dimension_numbers = #tpu.dot_dimension_numbers<[1], [0], [0], [1], [0, 0, 1, 1], [], []>} : vector<4x768xbf16>, vector<768x128xbf16>, vector<4x128xf32> -> vector<4x128xf32>
    %c0_3 = arith.constant 0 : index
    %c0_4 = arith.constant 0 : index
    %4 = vector.load %arg3[%c0_3, %c0_4] : memref<1x128xf32, #tpu.memory_space<vmem>>, vector<1x128xf32>
    %5 = vector.broadcast %4 : vector<1x128xf32> to vector<4x128xf32>
    %6 = arith.addf %3, %5 : vector<4x128xf32>
    %c0_5 = arith.constant 0 : index
    %c0_6 = arith.constant 0 : index
    %7 = vector.load %arg4[%c0_5, %c0_6] : memref<4x128xf32, #tpu.memory_space<vmem>>, vector<4x128xf32>
    tpu.vector_store %arg4[%c0_5, %c0_6], %6 {strides = array<i32>} : memref<4x128xf32, #tpu.memory_space<vmem>>, vector<4x128xf32>,
    return
  }
  func.func @transform_0(%arg0: i32) -> (i32, i32) {
    %c0_i32 = arith.constant 0 : i32
    %c0_i32_0 = arith.constant 0 : i32
    return %arg0, %c0_i32 : i32, i32
  }
  func.func @transform_1(%arg0: i32) -> (i32, i32) {
    %c0_i32 = arith.constant 0 : i32
    %c0_i32_0 = arith.constant 0 : i32
    %c0_i32_1 = arith.constant 0 : i32
    return %c0_i32, %c0_i32_0 : i32, i32
  }
  func.func @transform_2(%arg0: i32) -> (i32, i32) {
    %c0_i32 = arith.constant 0 : i32
    %c0_i32_0 = arith.constant 0 : i32
    %c0_i32_1 = arith.constant 0 : i32
    return %c0_i32, %c0_i32_0 : i32, i32
  }
  func.func @transform_3(%arg0: i32) -> (i32, i32) {
    %c0_i32 = arith.constant 0 : i32
    %c0_i32_0 = arith.constant 0 : i32
    return %arg0, %c0_i32 : i32, i32
  }
}

</mosaic_0001>

<llo_original>
// kernel: tpu_custom_call.1
$region0: #{tpu_custom_call.1}
  #allocation0 [shape = 'u32[]', space=smem, size = 0x4, offset = 0x4, fixed_abs, tag = 'smem constant byte address 0x4 - core index']
  #allocation1 [shape = 'u32[72,128]{1,0:T(1,128)}', space=vmem, size = 0x9000, scoped, tag = 'internal scratch']
  %s0 = inlined_call_operand.hbm [shape: f32[4,768], index: 0, kind: input, shape index: {}]
  %s1 = inlined_call_operand.hbm [shape: bf16[768,128], index: 1, kind: input, shape index: {}]
  %s2 = inlined_call_operand.vmem [shape: f32[1,128], index: 2, kind: input, shape index: {}]
  %s3 = inlined_call_operand.hbm [shape: f32[4,128], index: 3, kind: output, shape index: {}]
  %s4 = sld [smem:[#allocation0]]
  $region30: #{tpu_custom_call.1} parent=0
    _
  %s6 = ssub.s32 1, %s4
  %s7 = scalar_select 0, %s6, %s4
  $region1: #{tpu_custom_call.1} parent=0
    #allocation2 [shape = 'u8[12288]{0}', space=vmem, size = 0x3000, scoped, tag = 'input window, operand 0, single buffered']
    #allocation3 [shape = 's32[1]{0}', space=sflag, size = 0x4, scoped, tag = 'scoped memory for tpu_custom_call.1']
    #allocation4 [shape = 's32[1]{0}', space=sflag, size = 0x4, scoped, tag = 'scoped memory for tpu_custom_call.1']
    #allocation5 [shape = 'u8[196608]{0}', space=vmem, size = 0x30000, scoped, tag = 'input window, operand 1, single buffered']
    #allocation6 [shape = 's32[1]{0}', space=sflag, size = 0x4, scoped, tag = 'scoped memory for tpu_custom_call.1']
    #allocation7 [shape = 'u8[2048]{0}', space=vmem, size = 0x800, scoped, tag = 'output window, operand 0, single buffered']
    %8 = vsyncpa [#allocation3], 0
    %9 = vsyncpa [#allocation6], 0
    %10 = vsyncpa [#allocation4], 0
    // Predicated region
    $region2: #{tpu_custom_call.1} parent=1 // pred_check
      _
    $region3: #{tpu_custom_call.1} parent=1 // pred_check_branch
      %12 = sbr.rel (0) target = $region5
    $region4: #{tpu_custom_call.1} parent=1 // pred_region
      %14 = vsyncadd [#allocation3], 0
      %s16 = sshll.u32 %s0, 4
      %s17 = int_to_ptr.hbm [resolvable:$true] %s16
      %s18 = sshll.u32 [#allocation2], 4
      %s19 = int_to_ptr.vmem [resolvable:$true] %s18
      %21 = dma.hbm_to_vmem [thread:$0]  %s17, 384, %s19, [#allocation3]
    $region5: #{tpu_custom_call.1} parent=1 // pred_fallthru
      _
    // Predicated region
    $region6: #{tpu_custom_call.1} parent=1 // pred_check
      _
    $region7: #{tpu_custom_call.1} parent=1 // pred_check_branch
      %23 = sbr.rel (0) target = $region9
    $region8: #{tpu_custom_call.1} parent=1 // pred_region
      %25 = vsyncadd [#allocation6], 0
      %s26 = sshll.u32 %s1, 4
      %s27 = int_to_ptr.hbm [resolvable:$true] %s26
      %s28 = sshll.u32 [#allocation5], 4
      %s29 = int_to_ptr.vmem [resolvable:$true] %s28
      %34 = dma.hbm_to_vmem [thread:$0]  %s27, 6144, %s29, [#allocation6], 64, 64, 4
    $region9: #{tpu_custom_call.1} parent=1 // pred_fallthru
      _
    // Predicated region
    $region10: #{tpu_custom_call.1} parent=1 // pred_check
      _
    $region11: #{tpu_custom_call.1} parent=1 // pred_check_branch
      %36 = sbr.rel (0) target = $region13
    $region12: #{tpu_custom_call.1} parent=1 // pred_region
      _
    $region13: #{tpu_custom_call.1} parent=1 // pred_fallthru
      _
    // Predicated region
    $region14: #{tpu_custom_call.1} parent=1 // pred_check
      _
    $region15: #{tpu_custom_call.1} parent=1 // pred_check_branch
      %38 = sbr.rel (0) target = $region17
    $region16: #{tpu_custom_call.1} parent=1 // pred_region
      %40 = dma.done [#allocation3], 384
    $region17: #{tpu_custom_call.1} parent=1 // pred_fallthru
      _
    // Predicated region
    $region18: #{tpu_custom_call.1} parent=1 // pred_check
      _
    $region19: #{tpu_custom_call.1} parent=1 // pred_check_branch
      %42 = sbr.rel (0) target = $region21
    $region20: #{tpu_custom_call.1} parent=1 // pred_region
      %44 = dma.done [#allocation6], 6144
    $region21: #{tpu_custom_call.1} parent=1 // pred_fallthru
      _
    %v45 = vld [vmem:[#allocation2] sm:$0xff]
    %v46 = vld [vmem:[#allocation2 + $0x8] sm:$0xff]
    %v47 = vld [vmem:[#allocation2 + $0x10] sm:$0xff]
    %51 = vst [vmem:[#allocation1] ss:$2 sm:$0xff] %v45
    %s52 = scalar_lea.vmem [#allocation1], 16
    %53 = vst [vmem:[%s52] ss:$2 sm:$0xff] %v46
    %s54 = scalar_lea.vmem [#allocation1], 32
    %55 = vst [vmem:[%s54] ss:$2 sm:$0xff] %v47
    %v56 = vld.sshfl [vmem:[#allocation1] sm:$0xff pattern:$0x75316420]
    %v57 = vld.sshfl [vmem:[#allocation1 + $0x8] sm:$0xff pattern:$0x75316420]
    %v58 = vld.sshfl [vmem:[#allocation1 + $0x10] sm:$0xff pattern:$0x75316420]
    %v59 = vld.sshfl [vmem:[#allocation1 + $0x18] sm:$0xff pattern:$0x75316420]
    %v60 = vld.sshfl [vmem:[#allocation1 + $0x20] sm:$0xff pattern:$0x75316420]
    %v61 = vld.sshfl [vmem:[#allocation1 + $0x28] sm:$0xff pattern:$0x75316420]
    %v68 = vpack.c.bf16 %v56, %v56
    %v69 = vpack.c.bf16 %v57, %v57
    %v70 = vpack.c.bf16 %v58, %v58
    %v71 = vpack.c.bf16 %v59, %v59
    %v72 = vpack.c.bf16 %v60, %v60
    %v73 = vpack.c.bf16 %v61, %v61
    %v74 = vld [vmem:[#allocation5] sm:$0xf]
    %v75 = vld [vmem:[#allocation5 + $0x4] sm:$0xf]
    %v76 = vld [vmem:[#allocation5 + $0x8] sm:$0xf]
    %v77 = vld [vmem:[#allocation5 + $0xc] sm:$0xf]
    %v78 = vld [vmem:[#allocation5 + $0x10] sm:$0xf]
    %v79 = vld [vmem:[#allocation5 + $0x14] sm:$0xf]
    %v80 = vld [vmem:[#allocation5 + $0x18] sm:$0xf]
    %v81 = vld [vmem:[#allocation5 + $0x1c] sm:$0xf]
    %v82 = vld [vmem:[#allocation5 + $0x20] sm:$0xf]
    %v83 = vld [vmem:[#allocation5 + $0x24] sm:$0xf]
    %v84 = vld [vmem:[#allocation5 + $0x28] sm:$0xf]
    %v85 = vld [vmem:[#allocation5 + $0x2c] sm:$0xf]
    %v86 = vld [vmem:[#allocation5 + $0x30] sm:$0xf]
    %v87 = vld [vmem:[#allocation5 + $0x34] sm:$0xf]
    %v88 = vld [vmem:[#allocation5 + $0x38] sm:$0xf]
    %v89 = vld [vmem:[#allocation5 + $0x3c] sm:$0xf]
    %v90 = vld [vmem:[#allocation5 + $0x40] sm:$0xf]
    %v91 = vld [vmem:[#allocation5 + $0x44] sm:$0xf]
    %v92 = vld [vmem:[#allocation5 + $0x48] sm:$0xf]
    %v93 = vld [vmem:[#allocation5 + $0x4c] sm:$0xf]
    %v94 = vld [vmem:[#allocation5 + $0x50] sm:$0xf]
    %v95 = vld [vmem:[#allocation5 + $0x54] sm:$0xf]
    %v96 = vld [vmem:[#allocation5 + $0x58] sm:$0xf]
    %v97 = vld [vmem:[#allocation5 + $0x5c] sm:$0xf]
    %v98 = vld [vmem:[#allocation5 + $0x60] sm:$0xf]
    %v99 = vld [vmem:[#allocation5 + $0x64] sm:$0xf]
    %v100 = vld [vmem:[#allocation5 + $0x68] sm:$0xf]
    %v101 = vld [vmem:[#allocation5 + $0x6c] sm:$0xf]
    %v102 = vld [vmem:[#allocation5 + $0x70] sm:$0xf]
    %v103 = vld [vmem:[#allocation5 + $0x74] sm:$0xf]
    %v104 = vld [vmem:[#allocation5 + $0x78] sm:$0xf]
    %v105 = vld [vmem:[#allocation5 + $0x7c] sm:$0xf]
    %v106 = vld [vmem:[#allocation5 + $0x80] sm:$0xf]
    %v107 = vld [vmem:[#allocation5 + $0x84] sm:$0xf]
    %v108 = vld [vmem:[#allocation5 + $0x88] sm:$0xf]
    %v109 = vld [vmem:[#allocation5 + $0x8c] sm:$0xf]
    %v110 = vld [vmem:[#allocation5 + $0x90] sm:$0xf]
    %v111 = vld [vmem:[#allocation5 + $0x94] sm:$0xf]
    %v112 = vld [vmem:[#allocation5 + $0x98] sm:$0xf]
    %v113 = vld [vmem:[#allocation5 + $0x9c] sm:$0xf]
    %v114 = vld [vmem:[#allocation5 + $0xa0] sm:$0xf]
    %v115 = vld [vmem:[#allocation5 + $0xa4] sm:$0xf]
    %v116 = vld [vmem:[#allocation5 + $0xa8] sm:$0xf]
    %v117 = vld [vmem:[#allocation5 + $0xac] sm:$0xf]
    %v118 = vld [vmem:[#allocation5 + $0xb0] sm:$0xf]
    %v119 = vld [vmem:[#allocation5 + $0xb4] sm:$0xf]
    %v120 = vld [vmem:[#allocation5 + $0xb8] sm:$0xf]
    %v121 = vld [vmem:[#allocation5 + $0xbc] sm:$0xf]
    %v122 = vld [vmem:[#allocation5 + $0xc0] sm:$0xf]
    %v123 = vld [vmem:[#allocation5 + $0xc4] sm:$0xf]
    %v124 = vld [vmem:[#allocation5 + $0xc8] sm:$0xf]
    %v125 = vld [vmem:[#allocation5 + $0xcc] sm:$0xf]
    %v126 = vld [vmem:[#allocation5 + $0xd0] sm:$0xf]
    %v127 = vld [vmem:[#allocation5 + $0xd4] sm:$0xf]
    %v128 = vld [vmem:[#allocation5 + $0xd8] sm:$0xf]
    %v129 = vld [vmem:[#allocation5 + $0xdc] sm:$0xf]
    %v130 = vld [vmem:[#allocation5 + $0xe0] sm:$0xf]
    %v131 = vld [vmem:[#allocation5 + $0xe4] sm:$0xf]
    %v132 = vld [vmem:[#allocation5 + $0xe8] sm:$0xf]
    %v133 = vld [vmem:[#allocation5 + $0xec] sm:$0xf]
    %v134 = vld [vmem:[#allocation5 + $0xf0] sm:$0xf]
    %v135 = vld [vmem:[#allocation5 + $0xf4] sm:$0xf]
    %v136 = vld [vmem:[#allocation5 + $0xf8] sm:$0xf]
    %v137 = vld [vmem:[#allocation5 + $0xfc] sm:$0xf]
    %v138 = vld [vmem:[#allocation5 + $0x100] sm:$0xf]
    %v139 = vld [vmem:[#allocation5 + $0x104] sm:$0xf]
    %v140 = vld [vmem:[#allocation5 + $0x108] sm:$0xf]
    %v141 = vld [vmem:[#allocation5 + $0x10c] sm:$0xf]
    %v142 = vld [vmem:[#allocation5 + $0x110] sm:$0xf]
    %v143 = vld [vmem:[#allocation5 + $0x114] sm:$0xf]
    %v144 = vld [vmem:[#allocation5 + $0x118] sm:$0xf]
    %v145 = vld [vmem:[#allocation5 + $0x11c] sm:$0xf]
    %v146 = vld [vmem:[#allocation5 + $0x120] sm:$0xf]
    %v147 = vld [vmem:[#allocation5 + $0x124] sm:$0xf]
    %v148 = vld [vmem:[#allocation5 + $0x128] sm:$0xf]
    %v149 = vld [vmem:[#allocation5 + $0x12c] sm:$0xf]
    %v150 = vld [vmem:[#allocation5 + $0x130] sm:$0xf]
    %v151 = vld [vmem:[#allocation5 + $0x134] sm:$0xf]
    %v152 = vld [vmem:[#allocation5 + $0x138] sm:$0xf]
    %v153 = vld [vmem:[#allocation5 + $0x13c] sm:$0xf]
    %v154 = vld [vmem:[#allocation5 + $0x140] sm:$0xf]
    %v155 = vld [vmem:[#allocation5 + $0x144] sm:$0xf]
    %v156 = vld [vmem:[#allocation5 + $0x148] sm:$0xf]
    %v157 = vld [vmem:[#allocation5 + $0x14c] sm:$0xf]
    %v158 = vld [vmem:[#allocation5 + $0x150] sm:$0xf]
    %v159 = vld [vmem:[#allocation5 + $0x154] sm:$0xf]
    %v160 = vld [vmem:[#allocation5 + $0x158] sm:$0xf]
    %v161 = vld [vmem:[#allocation5 + $0x15c] sm:$0xf]
    %v162 = vld [vmem:[#allocation5 + $0x160] sm:$0xf]
    %v163 = vld [vmem:[#allocation5 + $0x164] sm:$0xf]
    %v164 = vld [vmem:[#allocation5 + $0x168] sm:$0xf]
    %v165 = vld [vmem:[#allocation5 + $0x16c] sm:$0xf]
    %v166 = vld [vmem:[#allocation5 + $0x170] sm:$0xf]
    %v167 = vld [vmem:[#allocation5 + $0x174] sm:$0xf]
    %v168 = vld [vmem:[#allocation5 + $0x178] sm:$0xf]
    %v169 = vld [vmem:[#allocation5 + $0x17c] sm:$0xf]
    %v170 = vld [vmem:[%s2] sm:$0x1]
    %v172 = vperm.slane %v170, 0
    %v270 = vunpack.c.l.b16 %v74
    %v271 = vunpack.c.l.b16 %v75
    %v272 = vunpack.c.l.b16 %v76
    %v273 = vunpack.c.l.b16 %v77
    %v274 = vunpack.c.l.b16 %v78
    %v275 = vunpack.c.l.b16 %v79
    %v276 = vunpack.c.l.b16 %v80
    %v277 = vunpack.c.l.b16 %v81
    %v278 = vunpack.c.l.b16 %v82
    %v279 = vunpack.c.l.b16 %v83
    %v280 = vunpack.c.l.b16 %v84
    %v281 = vunpack.c.l.b16 %v85
    %v282 = vunpack.c.l.b16 %v86
    %v283 = vunpack.c.l.b16 %v87
    %v284 = vunpack.c.l.b16 %v88
    %v285 = vunpack.c.l.b16 %v89
    %v286 = vunpack.c.l.b16 %v90
    %v287 = vunpack.c.l.b16 %v91
    %v288 = vunpack.c.l.b16 %v92
    %v289 = vunpack.c.l.b16 %v93
    %v290 = vunpack.c.l.b16 %v94
    %v291 = vunpack.c.l.b16 %v95
    %v292 = vunpack.c.l.b16 %v96
    %v293 = vunpack.c.l.b16 %v97
    %v294 = vunpack.c.l.b16 %v98
    %v295 = vunpack.c.l.b16 %v99
    %v296 = vunpack.c.l.b16 %v100
    %v297 = vunpack.c.l.b16 %v101
    %v298 = vunpack.c.l.b16 %v102
    %v299 = vunpack.c.l.b16 %v103
    %v300 = vunpack.c.l.b16 %v104
    %v301 = vunpack.c.l.b16 %v105
    %v302 = vunpack.c.l.b16 %v106
    %v303 = vunpack.c.l.b16 %v107
    %v304 = vunpack.c.l.b16 %v108
    %v305 = vunpack.c.l.b16 %v109
    %v306 = vunpack.c.l.b16 %v110
    %v307 = vunpack.c.l.b16 %v111
    %v308 = vunpack.c.l.b16 %v112
    %v309 = vunpack.c.l.b16 %v113
    %v310 = vunpack.c.l.b16 %v114
    %v311 = vunpack.c.l.b16 %v115
    %v312 = vunpack.c.l.b16 %v116
    %v313 = vunpack.c.l.b16 %v117
    %v314 = vunpack.c.l.b16 %v118
    %v315 = vunpack.c.l.b16 %v119
    %v316 = vunpack.c.l.b16 %v120
    %v317 = vunpack.c.l.b16 %v121
    %v318 = vunpack.c.l.b16 %v122
    %v319 = vunpack.c.l.b16 %v123
    %v320 = vunpack.c.l.b16 %v124
    %v321 = vunpack.c.l.b16 %v125
    %v322 = vunpack.c.l.b16 %v126
    %v323 = vunpack.c.l.b16 %v127
    %v324 = vunpack.c.l.b16 %v128
    %v325 = vunpack.c.l.b16 %v129
    %v326 = vunpack.c.l.b16 %v130
    %v327 = vunpack.c.l.b16 %v131
    %v328 = vunpack.c.l.b16 %v132
    %v329 = vunpack.c.l.b16 %v133
    %v330 = vunpack.c.l.b16 %v134
    %v331 = vunpack.c.l.b16 %v135
    %v332 = vunpack.c.l.b16 %v136
    %v333 = vunpack.c.l.b16 %v137
    %v334 = vunpack.c.l.b16 %v138
    %v335 = vunpack.c.l.b16 %v139
    %v336 = vunpack.c.l.b16 %v140
    %v337 = vunpack.c.l.b16 %v141
    %v338 = vunpack.c.l.b16 %v142
    %v339 = vunpack.c.l.b16 %v143
    %v340 = vunpack.c.l.b16 %v144
    %v341 = vunpack.c.l.b16 %v145
    %v342 = vunpack.c.l.b16 %v146
    %v343 = vunpack.c.l.b16 %v147
    %v344 = vunpack.c.l.b16 %v148
    %v345 = vunpack.c.l.b16 %v149
    %v346 = vunpack.c.l.b16 %v150
    %v347 = vunpack.c.l.b16 %v151
    %v348 = vunpack.c.l.b16 %v152
    %v349 = vunpack.c.l.b16 %v153
    %v350 = vunpack.c.l.b16 %v154
    %v351 = vunpack.c.l.b16 %v155
    %v352 = vunpack.c.l.b16 %v156
    %v353 = vunpack.c.l.b16 %v157
    %v354 = vunpack.c.l.b16 %v158
    %v355 = vunpack.c.l.b16 %v159
    %v356 = vunpack.c.l.b16 %v160
    %v357 = vunpack.c.l.b16 %v161
    %v358 = vunpack.c.l.b16 %v162
    %v359 = vunpack.c.l.b16 %v163
    %v360 = vunpack.c.l.b16 %v164
    %v361 = vunpack.c.l.b16 %v165
    %v362 = vunpack.c.l.b16 %v166
    %v363 = vunpack.c.l.b16 %v167
    %v364 = vunpack.c.l.b16 %v168
    %v365 = vunpack.c.l.b16 %v169
    %v366 = vpack.c.b16 %v271, %v270
    %v367 = vpack.c.b16 %v273, %v272
    %v368 = vpack.c.b16 %v275, %v274
    %v369 = vpack.c.b16 %v277, %v276
    %v370 = vpack.c.b16 %v279, %v278
    %v371 = vpack.c.b16 %v281, %v280
    %v372 = vpack.c.b16 %v283, %v282
    %v373 = vpack.c.b16 %v285, %v284
    %v374 = vpack.c.b16 %v287, %v286
    %v375 = vpack.c.b16 %v289, %v288
    %v376 = vpack.c.b16 %v291, %v290
    %v377 = vpack.c.b16 %v293, %v292
    %v378 = vpack.c.b16 %v295, %v294
    %v379 = vpack.c.b16 %v297, %v296
    %v380 = vpack.c.b16 %v299, %v298
    %v381 = vpack.c.b16 %v301, %v300
    %v382 = vpack.c.b16 %v303, %v302
    %v383 = vpack.c.b16 %v305, %v304
    %v384 = vpack.c.b16 %v307, %v306
    %v385 = vpack.c.b16 %v309, %v308
    %v386 = vpack.c.b16 %v311, %v310
    %v387 = vpack.c.b16 %v313, %v312
    %v388 = vpack.c.b16 %v315, %v314
    %v389 = vpack.c.b16 %v317, %v316
    %v390 = vpack.c.b16 %v319, %v318
    %v391 = vpack.c.b16 %v321, %v320
    %v392 = vpack.c.b16 %v323, %v322
    %v393 = vpack.c.b16 %v325, %v324
    %v394 = vpack.c.b16 %v327, %v326
    %v395 = vpack.c.b16 %v329, %v328
    %v396 = vpack.c.b16 %v331, %v330
    %v397 = vpack.c.b16 %v333, %v332
    %v398 = vpack.c.b16 %v335, %v334
    %v399 = vpack.c.b16 %v337, %v336
    %v400 = vpack.c.b16 %v339, %v338
    %v401 = vpack.c.b16 %v341, %v340
    %v402 = vpack.c.b16 %v343, %v342
    %v403 = vpack.c.b16 %v345, %v344
    %v404 = vpack.c.b16 %v347, %v346
    %v405 = vpack.c.b16 %v349, %v348
    %v406 = vpack.c.b16 %v351, %v350
    %v407 = vpack.c.b16 %v353, %v352
    %v408 = vpack.c.b16 %v355, %v354
    %v409 = vpack.c.b16 %v357, %v356
    %v410 = vpack.c.b16 %v359, %v358
    %v411 = vpack.c.b16 %v361, %v360
    %v412 = vpack.c.b16 %v363, %v362
    %v413 = vpack.c.b16 %v365, %v364
    %462 = vmatpush.bf16.msra.mxu0 %v373
    %463 = vmatpush.bf16.msra.mxu0 %v372
    %464 = vmatpush.bf16.msra.mxu0 %v371
    %465 = vmatpush.bf16.msra.mxu0 %v370
    %466 = vmatpush.bf16.msra.mxu0 %v369
    %467 = vmatpush.bf16.msra.mxu0 %v368
    %468 = vmatpush.bf16.msra.mxu0 %v367
    %469 = vmatpush.bf16.msra.mxu0 %v366
    %470 = vmatmul.bf16.gmra.mxu0 %v68
    %v471 = vpop.f32.mrf.mxu0
    %v472 = vadd.f32 %v172, %v471
    %v473 = vpop.f32.mrf.mxu0
    %474 = vdwg.mxu0
    %475 = vmatpush.bf16.msra.mxu0 %v381
    %476 = vmatpush.bf16.msra.mxu0 %v380
    %477 = vmatpush.bf16.msra.mxu0 %v379
    %478 = vmatpush.bf16.msra.mxu0 %v378
    %479 = vmatpush.bf16.msra.mxu0 %v377
    %480 = vmatpush.bf16.msra.mxu0 %v376
    %481 = vmatpush.bf16.msra.mxu0 %v375
    %482 = vmatpush.bf16.msra.mxu0 %v374
    %483 = vmatmul.bf16.gmra.mxu0 %v69
    %v484 = vpop.f32.mrf.mxu0
    %v485 = vadd.f32 %v472, %v484
    %v486 = vpop.f32.mrf.mxu0
    %487 = vdwg.mxu0
    %488 = vmatpush.bf16.msra.mxu0 %v389
    %489 = vmatpush.bf16.msra.mxu0 %v388
    %490 = vmatpush.bf16.msra.mxu0 %v387
    %491 = vmatpush.bf16.msra.mxu0 %v386
    %492 = vmatpush.bf16.msra.mxu0 %v385
    %493 = vmatpush.bf16.msra.mxu0 %v384
    %494 = vmatpush.bf16.msra.mxu0 %v383
    %495 = vmatpush.bf16.msra.mxu0 %v382
    %496 = vmatmul.bf16.gmra.mxu0 %v70
    %v497 = vpop.f32.mrf.mxu0
    %v498 = vadd.f32 %v485, %v497
    %v499 = vpop.f32.mrf.mxu0
    %500 = vdwg.mxu0
    %501 = vmatpush.bf16.msra.mxu0 %v397
    %502 = vmatpush.bf16.msra.mxu0 %v396
    %503 = vmatpush.bf16.msra.mxu0 %v395
    %504 = vmatpush.bf16.msra.mxu0 %v394
    %505 = vmatpush.bf16.msra.mxu0 %v393
    %506 = vmatpush.bf16.msra.mxu0 %v392
    %507 = vmatpush.bf16.msra.mxu0 %v391
    %508 = vmatpush.bf16.msra.mxu0 %v390
    %509 = vmatmul.bf16.gmra.mxu0 %v71
    %v510 = vpop.f32.mrf.mxu0
    %v511 = vadd.f32 %v498, %v510
    %v512 = vpop.f32.mrf.mxu0
    %513 = vdwg.mxu0
    %514 = vmatpush.bf16.msra.mxu0 %v405
    %515 = vmatpush.bf16.msra.mxu0 %v404
    %516 = vmatpush.bf16.msra.mxu0 %v403
    %517 = vmatpush.bf16.msra.mxu0 %v402
    %518 = vmatpush.bf16.msra.mxu0 %v401
    %519 = vmatpush.bf16.msra.mxu0 %v400
    %520 = vmatpush.bf16.msra.mxu0 %v399
    %521 = vmatpush.bf16.msra.mxu0 %v398
    %522 = vmatmul.bf16.gmra.mxu0 %v72
    %v523 = vpop.f32.mrf.mxu0
    %v524 = vadd.f32 %v511, %v523
    %v525 = vpop.f32.mrf.mxu0
    %526 = vdwg.mxu0
    %527 = vmatpush.bf16.msra.mxu0 %v413
    %528 = vmatpush.bf16.msra.mxu0 %v412
    %529 = vmatpush.bf16.msra.mxu0 %v411
    %530 = vmatpush.bf16.msra.mxu0 %v410
    %531 = vmatpush.bf16.msra.mxu0 %v409
    %532 = vmatpush.bf16.msra.mxu0 %v408
    %533 = vmatpush.bf16.msra.mxu0 %v407
    %534 = vmatpush.bf16.msra.mxu0 %v406
    %535 = vmatmul.bf16.gmra.mxu0 %v73
    %v536 = vpop.f32.mrf.mxu0
    %v537 = vadd.f32 %v524, %v536
    %v538 = vpop.f32.mrf.mxu0
    %539 = vdwg.mxu0
    %540 = vst [vmem:[#allocation7] sm:$0xf] %v537
    // Predicated region
    $region22: #{tpu_custom_call.1} parent=1 // pred_check
      _
    $region23: #{tpu_custom_call.1} parent=1 // pred_check_branch
      %542 = sbr.rel (0) target = $region25
    $region24: #{tpu_custom_call.1} parent=1 // pred_region
      %544 = vsyncadd [#allocation4], 0
      %s546 = sshll.u32 [#allocation7], 4
      %s547 = int_to_ptr.vmem [resolvable:$true] %s546
      %s548 = sshll.u32 %s3, 4
      %s549 = int_to_ptr.hbm [resolvable:$true] %s548
      %551 = dma.vmem_to_hbm [thread:$0]  %s547, 64, %s549, [#allocation4]
    $region25: #{tpu_custom_call.1} parent=1 // pred_fallthru
      _
    // Predicated region
    $region26: #{tpu_custom_call.1} parent=1 // pred_check
      _
    $region27: #{tpu_custom_call.1} parent=1 // pred_check_branch
      %553 = sbr.rel (0) target = $region29
    $region28: #{tpu_custom_call.1} parent=1 // pred_region
      %555 = dma.done [#allocation4], 64
    $region29: #{tpu_custom_call.1} parent=1 // pred_fallthru
      _
    %556 = vsyncpa [#allocation3], 1
    %557 = vsyncpa [#allocation6], 1
    %558 = vsyncpa [#allocation4], 1

</llo_original>
